<compile_context>
chip_gen: v7x
topology: tpu7x:2x2x1
jax: 0.10.0
libtpu: 0.0.40
codegen_flags: <defaults>
</compile_context>

<pallas_src>
import functools

import jax
import jax.numpy as jnp
from jax.experimental import pallas as pl
from jax.experimental.pallas import tpu as pltpu

LANE = 128          # vreg lane width
TILE_ALIGN = 16     # sublane alignment for bf16 tiles (also satisfies f32's 8)
MAX_TILE_B = 2048   # ~11 MiB double-buffered footprint with bf16 x -> fits the
                    # 32 MiB scoped VMEM limit on v5e / v6e / v7x
                    # (can be raised to ~4096 on v6e with a larger vmem_limit_bytes)
VMEM_LIMIT_BYTES = 32 * 1024 * 1024


def _round_up(x, m):
    return (x + m - 1) // m * m


# ----------------------------------------------------------------------------
# Fused MLP kernel: all layers in one body, weights resident in VMEM.
# refs = (x_ref, w0_ref, b0_ref, ..., wN_ref, bN_ref, o_ref)
# ----------------------------------------------------------------------------
def _fused_mlp_kernel(*refs, n_layers: int):
    x_ref = refs[0]
    o_ref = refs[-1]
    wb = refs[1:-1]

    h = x_ref[...]                                        # (tile_b, 784) bf16
    for i in range(n_layers):
        w = wb[2 * i][...]                                # bf16 weights (lane-padded hidden)
        b = wb[2 * i + 1][...]                            # (1, out) f32 bias
        acc = jnp.dot(h, w, preferred_element_type=jnp.float32) + b
        if i != n_layers - 1:
            h = jnp.maximum(acc, 0.0).astype(jnp.bfloat16)  # ReLU, bf16 back into the MXU
        else:
            h = acc                                       # final layer: no ReLU
    o_ref[...] = h.astype(o_ref.dtype)                    # true-width (tile_b, 10) store


# ----------------------------------------------------------------------------
# One-time parameter preparation (hoisted out of the per-call forward path).
# params: list of (w, b) with w shape (in, out) [== torch W^T], b shape (out,).
# Hidden output widths are zero-padded to 128 lanes (exact zeros -> identical
# math); the final layer keeps its true width. Weights are cast to bf16.
# ----------------------------------------------------------------------------
def prepare_tiny_mlp_params(params):
    n_layers = len(params)
    prepared = []
    prev = params[0][0].shape[0]                          # 784
    for i, (w, b) in enumerate(params):
        di, do = w.shape
        do_pad = do if i == n_layers - 1 else _round_up(do, LANE)
        w_p = (jnp.zeros((prev, do_pad), jnp.float32)
               .at[:di, :do].set(w.astype(jnp.float32))
               .astype(jnp.bfloat16))
        b_p = jnp.zeros((1, do_pad), jnp.float32).at[:, :do].set(b.astype(jnp.float32))
        prepared.append((w_p, b_p))
        prev = do_pad
    return prepared


# ----------------------------------------------------------------------------
# Forward: single pallas_call, batch-tiled grid, ragged last tile, no padding
# copies and no output slicing in the wrapper.
# ----------------------------------------------------------------------------
def tiny_mlp_forward(prepared_params, x, *, max_tile_b=MAX_TILE_B):
    d_in = prepared_params[0][0].shape[0]                 # 784
    d_out = prepared_params[-1][0].shape[1]               # 10 (true width)
    n_layers = len(prepared_params)

    x = x.reshape(-1, d_in)                               # torch: x.view(-1, 28*28)
    if x.dtype != jnp.bfloat16:
        x = x.astype(jnp.bfloat16)                        # no-op if caller already feeds bf16
    B = x.shape[0]

    # >= 2 batch tiles whenever B allows it (v7x megacore), sublane-aligned for bf16.
    tile_b = min(max_tile_b, _round_up(max(pl.cdiv(B, 2), 1), TILE_ALIGN))
    grid = (pl.cdiv(B, tile_b),)                          # ragged last tile is clipped by Pallas

    in_specs = [pl.BlockSpec((tile_b, d_in), lambda i: (i, 0))]
    flat_wb = []
    for (w_p, b_p) in prepared_params:
        in_specs.append(pl.BlockSpec(w_p.shape, lambda i: (0, 0)))   # resident weights
        in_specs.append(pl.BlockSpec(b_p.shape, lambda i: (0, 0)))   # resident bias
        flat_wb.extend([w_p, b_p])

    kernel = functools.partial(_fused_mlp_kernel, n_layers=n_layers)

    out = pl.pallas_call(
        kernel,
        out_shape=jax.ShapeDtypeStruct((B, d_out), jnp.float32),     # true (B, 10) output
        grid=grid,
        in_specs=in_specs,
        out_specs=pl.BlockSpec((tile_b, d_out), lambda i: (i, 0)),
        compiler_params=pltpu.CompilerParams(
            dimension_semantics=("parallel",),            # batch tiles are independent
            vmem_limit_bytes=VMEM_LIMIT_BYTES,
        ),
    )(x, *flat_wb)
    return out


# ----------------------------------------------------------------------------
# Param init mimicking torch.nn.Linear default (uniform +-1/sqrt(fan_in)).
# Weights stored as (in, out) == torch W^T.
# ----------------------------------------------------------------------------
def init_tiny_mlp_params(nodes, key):
    params = []
    for i in range(len(nodes) - 1):
        fan_in, fan_out = nodes[i], nodes[i + 1]
        key, kw, kb = jax.random.split(key, 3)
        bound = 1.0 / jnp.sqrt(jnp.float32(fan_in))
        w = jax.random.uniform(kw, (fan_in, fan_out), jnp.float32, -bound, bound)
        b = jax.random.uniform(kb, (fan_out,), jnp.float32, -bound, bound)
        params.append((w, b))
    return params


# ----------------------------------------------------------------------------
# Pure-JAX f32 reference
# ----------------------------------------------------------------------------
def tiny_mlp_ref(params, x):
    x = x.reshape(-1, 28 * 28).astype(jnp.float32)
    n_layers = len(params)
    for i, (w, b) in enumerate(params):
        x = x @ w + b
        if i != n_layers - 1:
            x = jnp.maximum(x, 0.0)
    return x


if __name__ == "__main__":
    key = jax.random.PRNGKey(0)
    key, k_x, k_x2 = jax.random.split(key, 3)

    # TinyMlp([784, 32, 16, 10]): two hidden Linear+ReLU layers, final Linear.
    nodes = [28 * 28, 32, 16, 10]
    params = init_tiny_mlp_params(nodes, key)
    prepared = prepare_tiny_mlp_params(params)            # padded/bf16 once, not per call

    # Small MNIST-like batch, NCHW-style image input (B, 1, 28, 28), fed as bf16.
    x = jax.random.normal(k_x, (2, 1, 28, 28), jnp.float32).astype(jnp.bfloat16)
    out = jax.block_until_ready(tiny_mlp_forward(prepared, x))
    ref = tiny_mlp_ref(params, x.astype(jnp.float32))
    assert out.shape == (2, 10), out.shape
    assert jnp.allclose(out, ref, atol=2e-2, rtol=2e-2), (
        float(jnp.max(jnp.abs(out - ref)))
    )

    # Second check: B=45 exercises multiple batch tiles AND the ragged last tile
    # (no jnp.pad, no output slicing).
    x2 = jax.random.normal(k_x2, (45, 1, 28, 28), jnp.float32).astype(jnp.bfloat16)
    out2 = jax.block_until_ready(tiny_mlp_forward(prepared, x2))
    ref2 = tiny_mlp_ref(params, x2.astype(jnp.float32))
    assert out2.shape == (45, 10), out2.shape
    assert jnp.allclose(out2, ref2, atol=2e-2, rtol=2e-2), (
        float(jnp.max(jnp.abs(out2 - ref2)))
    )

    print("KERNEL_OK")
</pallas_src>

<mosaic_0001>
module attributes {stable_mosaic.version = 11 : i64} {
  func.func @_fused_mlp_kernel(%arg0: i32, %arg1: memref<16x784xbf16, #tpu.memory_space<vmem>>, %arg2: memref<784x128xbf16, #tpu.memory_space<vmem>>, %arg3: memref<1x128xf32, #tpu.memory_space<vmem>>, %arg4: memref<128x128xbf16, #tpu.memory_space<vmem>>, %arg5: memref<1x128xf32, #tpu.memory_space<vmem>>, %arg6: memref<128x10xbf16, #tpu.memory_space<vmem>>, %arg7: memref<1x10xf32, #tpu.memory_space<vmem>>, %arg8: memref<16x10xf32, #tpu.memory_space<vmem>>) attributes {dimension_semantics = [#tpu.dimension_semantics<parallel>], iteration_bounds = array<i64: 1>, scalar_prefetch = 0 : i64, scratch_operands = 0 : i64, tpu.core_type = #tpu.core_type<tc>, window_params = [{transform_indices = @transform_0, window_bounds = array<i64: 16, 784>}, {pipeline_mode = #tpu.pipeline_mode<synchronous>, transform_indices = @transform_1, window_bounds = array<i64: 784, 128>}, {pipeline_mode = #tpu.pipeline_mode<synchronous>, transform_indices = @transform_2, window_bounds = array<i64: 1, 128>}, {pipeline_mode = #tpu.pipeline_mode<synchronous>, transform_indices = @transform_3, window_bounds = array<i64: 128, 128>}, {pipeline_mode = #tpu.pipeline_mode<synchronous>, transform_indices = @transform_4, window_bounds = array<i64: 1, 128>}, {pipeline_mode = #tpu.pipeline_mode<synchronous>, transform_indices = @transform_5, window_bounds = array<i64: 128, 10>}, {pipeline_mode = #tpu.pipeline_mode<synchronous>, transform_indices = @transform_6, window_bounds = array<i64: 1, 10>}, {transform_indices = @transform_7, window_bounds = array<i64: 16, 10>}]} {
    %c0 = arith.constant 0 : index
    %c0_0 = arith.constant 0 : index
    %0 = vector.load %arg1[%c0, %c0_0] : memref<16x784xbf16, #tpu.memory_space<vmem>>, vector<16x784xbf16>
    %c0_1 = arith.constant 0 : index
    %c0_2 = arith.constant 0 : index
    %1 = vector.load %arg2[%c0_1, %c0_2] : memref<784x128xbf16, #tpu.memory_space<vmem>>, vector<784x128xbf16>
    %c0_3 = arith.constant 0 : index
    %c0_4 = arith.constant 0 : index
    %2 = vector.load %arg3[%c0_3, %c0_4] : memref<1x128xf32, #tpu.memory_space<vmem>>, vector<1x128xf32>
    %cst = arith.constant dense<0.000000e+00> : vector<16x128xf32>
    %3 = tpu.matmul %0, %1, %cst {dimension_numbers = #tpu.dot_dimension_numbers<[1], [0], [0], [1], [0, 0, 1, 1], [], []>} : vector<16x784xbf16>, vector<784x128xbf16>, vector<16x128xf32> -> vector<16x128xf32>
    %4 = vector.broadcast %2 : vector<1x128xf32> to vector<16x128xf32>
    %5 = arith.addf %3, %4 : vector<16x128xf32>
    %cst_5 = arith.constant 0.000000e+00 : f32
    %6 = vector.broadcast %cst_5 : f32 to vector<16x128xf32>
    %7 = arith.maximumf %5, %6 : vector<16x128xf32>
    %8 = arith.truncf %7 : vector<16x128xf32> to vector<16x128xbf16>
    %c0_6 = arith.constant 0 : index
    %c0_7 = arith.constant 0 : index
    %9 = vector.load %arg4[%c0_6, %c0_7] : memref<128x128xbf16, #tpu.memory_space<vmem>>, vector<128x128xbf16>
    %c0_8 = arith.constant 0 : index
    %c0_9 = arith.constant 0 : index
    %10 = vector.load %arg5[%c0_8, %c0_9] : memref<1x128xf32, #tpu.memory_space<vmem>>, vector<1x128xf32>
    %cst_10 = arith.constant dense<0.000000e+00> : vector<16x128xf32>
    %11 = tpu.matmul %8, %9, %cst_10 {dimension_numbers = #tpu.dot_dimension_numbers<[1], [0], [0], [1], [0, 0, 1, 1], [], []>} : vector<16x128xbf16>, vector<128x128xbf16>, vector<16x128xf32> -> vector<16x128xf32>
    %12 = vector.broadcast %10 : vector<1x128xf32> to vector<16x128xf32>
    %13 = arith.addf %11, %12 : vector<16x128xf32>
    %cst_11 = arith.constant 0.000000e+00 : f32
    %14 = vector.broadcast %cst_11 : f32 to vector<16x128xf32>
    %15 = arith.maximumf %13, %14 : vector<16x128xf32>
    %16 = arith.truncf %15 : vector<16x128xf32> to vector<16x128xbf16>
    %c0_12 = arith.constant 0 : index
    %c0_13 = arith.constant 0 : index
    %17 = vector.load %arg6[%c0_12, %c0_13] : memref<128x10xbf16, #tpu.memory_space<vmem>>, vector<128x10xbf16>
    %c0_14 = arith.constant 0 : index
    %c0_15 = arith.constant 0 : index
    %18 = vector.load %arg7[%c0_14, %c0_15] : memref<1x10xf32, #tpu.memory_space<vmem>>, vector<1x10xf32>
    %cst_16 = arith.constant dense<0.000000e+00> : vector<16x10xf32>
    %19 = tpu.matmul %16, %17, %cst_16 {dimension_numbers = #tpu.dot_dimension_numbers<[1], [0], [0], [1], [0, 0, 1, 1], [], []>} : vector<16x128xbf16>, vector<128x10xbf16>, vector<16x10xf32> -> vector<16x10xf32>
    %20 = vector.broadcast %18 : vector<1x10xf32> to vector<16x10xf32>
    %21 = arith.addf %19, %20 : vector<16x10xf32>
    %c0_17 = arith.constant 0 : index
    %c0_18 = arith.constant 0 : index
    %22 = vector.load %arg8[%c0_17, %c0_18] : memref<16x10xf32, #tpu.memory_space<vmem>>, vector<16x10xf32>
    tpu.vector_store %arg8[%c0_17, %c0_18], %21 {strides = array<i32>} : memref<16x10xf32, #tpu.memory_space<vmem>>, vector<16x10xf32>,
    return
  }
  func.func @transform_0(%arg0: i32) -> (i32, i32) {
    %c0_i32 = arith.constant 0 : i32
    %c0_i32_0 = arith.constant 0 : i32
    return %arg0, %c0_i32 : i32, i32
  }
  func.func @transform_1(%arg0: i32) -> (i32, i32) {
    %c0_i32 = arith.constant 0 : i32
    %c0_i32_0 = arith.constant 0 : i32
    %c0_i32_1 = arith.constant 0 : i32
    return %c0_i32, %c0_i32_0 : i32, i32
  }
  func.func @transform_2(%arg0: i32) -> (i32, i32) {
    %c0_i32 = arith.constant 0 : i32
    %c0_i32_0 = arith.constant 0 : i32
    %c0_i32_1 = arith.constant 0 : i32
    return %c0_i32, %c0_i32_0 : i32, i32
  }
  func.func @transform_3(%arg0: i32) -> (i32, i32) {
    %c0_i32 = arith.constant 0 : i32
    %c0_i32_0 = arith.constant 0 : i32
    %c0_i32_1 = arith.constant 0 : i32
    return %c0_i32, %c0_i32_0 : i32, i32
  }
  func.func @transform_4(%arg0: i32) -> (i32, i32) {
    %c0_i32 = arith.constant 0 : i32
    %c0_i32_0 = arith.constant 0 : i32
    %c0_i32_1 = arith.constant 0 : i32
    return %c0_i32, %c0_i32_0 : i32, i32
  }
  func.func @transform_5(%arg0: i32) -> (i32, i32) {
    %c0_i32 = arith.constant 0 : i32
    %c0_i32_0 = arith.constant 0 : i32
    %c0_i32_1 = arith.constant 0 : i32
    return %c0_i32, %c0_i32_0 : i32, i32
  }
  func.func @transform_6(%arg0: i32) -> (i32, i32) {
    %c0_i32 = arith.constant 0 : i32
    %c0_i32_0 = arith.constant 0 : i32
    %c0_i32_1 = arith.constant 0 : i32
    return %c0_i32, %c0_i32_0 : i32, i32
  }
  func.func @transform_7(%arg0: i32) -> (i32, i32) {
    %c0_i32 = arith.constant 0 : i32
    %c0_i32_0 = arith.constant 0 : i32
    return %arg0, %c0_i32 : i32, i32
  }
}

</mosaic_0001>

<llo_original>
// kernel: tpu_custom_call.1
$region0: #{tpu_custom_call.1}
  #allocation0 [shape = 'u32[]', space=smem, size = 0x4, offset = 0x4, fixed_abs, tag = 'smem constant byte address 0x4 - core index']
  #allocation1 [shape = 'u32[144,128]{1,0:T(1,128)}', space=vmem, size = 0x12000, scoped, tag = 'internal scratch']
  %s0 = inlined_call_operand.vmem [shape: bf16[2,784], index: 0, kind: input, shape index: {}]
  %s1 = inlined_call_operand.hbm [shape: bf16[784,128], index: 1, kind: input, shape index: {}]
  %s2 = inlined_call_operand.vmem [shape: f32[1,128], index: 2, kind: input, shape index: {}]
  %s3 = inlined_call_operand.vmem [shape: bf16[128,128], index: 3, kind: input, shape index: {}]
  %s4 = inlined_call_operand.vmem [shape: f32[1,128], index: 4, kind: input, shape index: {}]
  %s5 = inlined_call_operand.vmem [shape: bf16[128,10], index: 5, kind: input, shape index: {}]
  %s6 = inlined_call_operand.vmem [shape: f32[1,10], index: 6, kind: input, shape index: {}]
  %s7 = inlined_call_operand.hbm [shape: f32[2,10], index: 7, kind: output, shape index: {}]
  %s8 = sld [smem:[#allocation0]]
  $region42: #{tpu_custom_call.1} parent=0
    _
  %s10 = ssub.s32 1, %s8
  %s11 = scalar_select 0, %s10, %s8
  $region1: #{tpu_custom_call.1} parent=0
    #allocation2 [shape = 'u8[200704]{0}', space=vmem, size = 0x31000, scoped, tag = 'input window, operand 1, single buffered']
    #allocation3 [shape = 's32[1]{0}', space=sflag, size = 0x4, scoped, tag = 'scoped memory for tpu_custom_call.1']
    #allocation4 [shape = 's32[1]{0}', space=sflag, size = 0x4, scoped, tag = 'scoped memory for tpu_custom_call.1']
    #allocation5 [shape = 'u8[8192]{0}', space=vmem, size = 0x2000, scoped, tag = 'output window, operand 0, single buffered']
    %12 = vsyncpa [#allocation3], 0
    %13 = vsyncpa [#allocation4], 0
    // Predicated region
    $region2: #{tpu_custom_call.1} parent=1 // pred_check
      _
    $region3: #{tpu_custom_call.1} parent=1 // pred_check_branch
      %15 = sbr.rel (0) target = $region5
    $region4: #{tpu_custom_call.1} parent=1 // pred_region
      _
    $region5: #{tpu_custom_call.1} parent=1 // pred_fallthru
      _
    // Predicated region
    $region6: #{tpu_custom_call.1} parent=1 // pred_check
      _
    $region7: #{tpu_custom_call.1} parent=1 // pred_check_branch
      %17 = sbr.rel (0) target = $region9
    $region8: #{tpu_custom_call.1} parent=1 // pred_region
      %s19 = ssub.s32 6272, 6272
      %20 = vsyncadd [#allocation3], %s19
      %s21 = sshll.u32 [#allocation2], 4
      %s22 = int_to_ptr.vmem [resolvable:$true] %s21
      %27 = dma.hbm_to_vmem [thread:$0]  %s1, 6272, %s22, [#allocation3], 64, 64, 4
    $region9: #{tpu_custom_call.1} parent=1 // pred_fallthru
      _
    // Predicated region
    $region10: #{tpu_custom_call.1} parent=1 // pred_check
      _
    $region11: #{tpu_custom_call.1} parent=1 // pred_check_branch
      %29 = sbr.rel (0) target = $region13
    $region12: #{tpu_custom_call.1} parent=1 // pred_region
      _
    $region13: #{tpu_custom_call.1} parent=1 // pred_fallthru
      _
    // Predicated region
    $region14: #{tpu_custom_call.1} parent=1 // pred_check
      _
    $region15: #{tpu_custom_call.1} parent=1 // pred_check_branch
      %31 = sbr.rel (0) target = $region17
    $region16: #{tpu_custom_call.1} parent=1 // pred_region
      _
    $region17: #{tpu_custom_call.1} parent=1 // pred_fallthru
      _
    // Predicated region
    $region18: #{tpu_custom_call.1} parent=1 // pred_check
      _
    $region19: #{tpu_custom_call.1} parent=1 // pred_check_branch
      %33 = sbr.rel (0) target = $region21
    $region20: #{tpu_custom_call.1} parent=1 // pred_region
      _
    $region21: #{tpu_custom_call.1} parent=1 // pred_fallthru
      _
    // Predicated region
    $region22: #{tpu_custom_call.1} parent=1 // pred_check
      _
    $region23: #{tpu_custom_call.1} parent=1 // pred_check_branch
      %35 = sbr.rel (0) target = $region25
    $region24: #{tpu_custom_call.1} parent=1 // pred_region
      _
    $region25: #{tpu_custom_call.1} parent=1 // pred_fallthru
      _
    // Predicated region
    $region26: #{tpu_custom_call.1} parent=1 // pred_check
      _
    $region27: #{tpu_custom_call.1} parent=1 // pred_check_branch
      %37 = sbr.rel (0) target = $region29
    $region28: #{tpu_custom_call.1} parent=1 // pred_region
      _
    $region29: #{tpu_custom_call.1} parent=1 // pred_fallthru
      _
    // Predicated region
    $region30: #{tpu_custom_call.1} parent=1 // pred_check
      _
    $region31: #{tpu_custom_call.1} parent=1 // pred_check_branch
      %39 = sbr.rel (0) target = $region33
    $region32: #{tpu_custom_call.1} parent=1 // pred_region
      %40 = dma.done [#allocation3], 6272
    $region33: #{tpu_custom_call.1} parent=1 // pred_fallthru
      _
    %v42 = vld [vmem:[%s0] sm:$0x7f]
    %v43 = vld [vmem:[%s0 + $0x7] sm:$0x7f]
    %v44 = vld [vmem:[%s0 + $0xe] sm:$0x7f]
    %v45 = vld [vmem:[%s0 + $0x15] sm:$0x7f]
    %v46 = vld [vmem:[%s0 + $0x1c] sm:$0x7f]
    %v47 = vld [vmem:[%s0 + $0x23] sm:$0x7f]
    %v48 = vld [vmem:[%s0 + $0x2a] sm:$0x7f]
    %v49 = vld [vmem:[%s0 + $0x31] sm:$0x7f]
    %v50 = vld [vmem:[#allocation2] sm:$0xf]
    %v51 = vld [vmem:[#allocation2 + $0x4] sm:$0xf]
    %v52 = vld [vmem:[#allocation2 + $0x8] sm:$0xf]
    %v53 = vld [vmem:[#allocation2 + $0xc] sm:$0xf]
    %v54 = vld [vmem:[#allocation2 + $0x10] sm:$0xf]
    %v55 = vld [vmem:[#allocation2 + $0x14] sm:$0xf]
    %v56 = vld [vmem:[#allocation2 + $0x18] sm:$0xf]
    %v57 = vld [vmem:[#allocation2 + $0x1c] sm:$0xf]
    %v58 = vld [vmem:[#allocation2 + $0x20] sm:$0xf]
    %v59 = vld [vmem:[#allocation2 + $0x24] sm:$0xf]
    %v60 = vld [vmem:[#allocation2 + $0x28] sm:$0xf]
    %v61 = vld [vmem:[#allocation2 + $0x2c] sm:$0xf]
    %v62 = vld [vmem:[#allocation2 + $0x30] sm:$0xf]
    %v63 = vld [vmem:[#allocation2 + $0x34] sm:$0xf]
    %v64 = vld [vmem:[#allocation2 + $0x38] sm:$0xf]
    %v65 = vld [vmem:[#allocation2 + $0x3c] sm:$0xf]
    %v66 = vld [vmem:[#allocation2 + $0x40] sm:$0xf]
    %v67 = vld [vmem:[#allocation2 + $0x44] sm:$0xf]
    %v68 = vld [vmem:[#allocation2 + $0x48] sm:$0xf]
    %v69 = vld [vmem:[#allocation2 + $0x4c] sm:$0xf]
    %v70 = vld [vmem:[#allocation2 + $0x50] sm:$0xf]
    %v71 = vld [vmem:[#allocation2 + $0x54] sm:$0xf]
    %v72 = vld [vmem:[#allocation2 + $0x58] sm:$0xf]
    %v73 = vld [vmem:[#allocation2 + $0x5c] sm:$0xf]
    %v74 = vld [vmem:[#allocation2 + $0x60] sm:$0xf]
    %v75 = vld [vmem:[#allocation2 + $0x64] sm:$0xf]
    %v76 = vld [vmem:[#allocation2 + $0x68] sm:$0xf]
    %v77 = vld [vmem:[#allocation2 + $0x6c] sm:$0xf]
    %v78 = vld [vmem:[#allocation2 + $0x70] sm:$0xf]
    %v79 = vld [vmem:[#allocation2 + $0x74] sm:$0xf]
    %v80 = vld [vmem:[#allocation2 + $0x78] sm:$0xf]
    %v81 = vld [vmem:[#allocation2 + $0x7c] sm:$0xf]
    %v82 = vld [vmem:[#allocation2 + $0x80] sm:$0xf]
    %v83 = vld [vmem:[#allocation2 + $0x84] sm:$0xf]
    %v84 = vld [vmem:[#allocation2 + $0x88] sm:$0xf]
    %v85 = vld [vmem:[#allocation2 + $0x8c] sm:$0xf]
    %v86 = vld [vmem:[#allocation2 + $0x90] sm:$0xf]
    %v87 = vld [vmem:[#allocation2 + $0x94] sm:$0xf]
    %v88 = vld [vmem:[#allocation2 + $0x98] sm:$0xf]
    %v89 = vld [vmem:[#allocation2 + $0x9c] sm:$0xf]
    %v90 = vld [vmem:[#allocation2 + $0xa0] sm:$0xf]
    %v91 = vld [vmem:[#allocation2 + $0xa4] sm:$0xf]
    %v92 = vld [vmem:[#allocation2 + $0xa8] sm:$0xf]
    %v93 = vld [vmem:[#allocation2 + $0xac] sm:$0xf]
    %v94 = vld [vmem:[#allocation2 + $0xb0] sm:$0xf]
    %v95 = vld [vmem:[#allocation2 + $0xb4] sm:$0xf]
    %v96 = vld [vmem:[#allocation2 + $0xb8] sm:$0xf]
    %v97 = vld [vmem:[#allocation2 + $0xbc] sm:$0xf]
    %v98 = vld [vmem:[#allocation2 + $0xc0] sm:$0xf]
    %v99 = vld [vmem:[#allocation2 + $0xc4] sm:$0xf]
    %v100 = vld [vmem:[#allocation2 + $0xc8] sm:$0xf]
    %v101 = vld [vmem:[#allocation2 + $0xcc] sm:$0xf]
    %v102 = vld [vmem:[#allocation2 + $0xd0] sm:$0xf]
    %v103 = vld [vmem:[#allocation2 + $0xd4] sm:$0xf]
    %v104 = vld [vmem:[#allocation2 + $0xd8] sm:$0xf]
    %v105 = vld [vmem:[#allocation2 + $0xdc] sm:$0xf]
    %v106 = vld [vmem:[#allocation2 + $0xe0] sm:$0xf]
    %v107 = vld [vmem:[#allocation2 + $0xe4] sm:$0xf]
    %v108 = vld [vmem:[#allocation2 + $0xe8] sm:$0xf]
    %v109 = vld [vmem:[#allocation2 + $0xec] sm:$0xf]
    %v110 = vld [vmem:[#allocation2 + $0xf0] sm:$0xf]
    %v111 = vld [vmem:[#allocation2 + $0xf4] sm:$0xf]
    %v112 = vld [vmem:[#allocation2 + $0xf8] sm:$0xf]
    %v113 = vld [vmem:[#allocation2 + $0xfc] sm:$0xf]
    %v114 = vld [vmem:[#allocation2 + $0x100] sm:$0xf]
    %v115 = vld [vmem:[#allocation2 + $0x104] sm:$0xf]
    %v116 = vld [vmem:[#allocation2 + $0x108] sm:$0xf]
    %v117 = vld [vmem:[#allocation2 + $0x10c] sm:$0xf]
    %v118 = vld [vmem:[#allocation2 + $0x110] sm:$0xf]
    %v119 = vld [vmem:[#allocation2 + $0x114] sm:$0xf]
    %v120 = vld [vmem:[#allocation2 + $0x118] sm:$0xf]
    %v121 = vld [vmem:[#allocation2 + $0x11c] sm:$0xf]
    %v122 = vld [vmem:[#allocation2 + $0x120] sm:$0xf]
    %v123 = vld [vmem:[#allocation2 + $0x124] sm:$0xf]
    %v124 = vld [vmem:[#allocation2 + $0x128] sm:$0xf]
    %v125 = vld [vmem:[#allocation2 + $0x12c] sm:$0xf]
    %v126 = vld [vmem:[#allocation2 + $0x130] sm:$0xf]
    %v127 = vld [vmem:[#allocation2 + $0x134] sm:$0xf]
    %v128 = vld [vmem:[#allocation2 + $0x138] sm:$0xf]
    %v129 = vld [vmem:[#allocation2 + $0x13c] sm:$0xf]
    %v130 = vld [vmem:[#allocation2 + $0x140] sm:$0xf]
    %v131 = vld [vmem:[#allocation2 + $0x144] sm:$0xf]
    %v132 = vld [vmem:[#allocation2 + $0x148] sm:$0xf]
    %v133 = vld [vmem:[#allocation2 + $0x14c] sm:$0xf]
    %v134 = vld [vmem:[#allocation2 + $0x150] sm:$0xf]
    %v135 = vld [vmem:[#allocation2 + $0x154] sm:$0xf]
    %v136 = vld [vmem:[#allocation2 + $0x158] sm:$0xf]
    %v137 = vld [vmem:[#allocation2 + $0x15c] sm:$0xf]
    %v138 = vld [vmem:[#allocation2 + $0x160] sm:$0xf]
    %v139 = vld [vmem:[#allocation2 + $0x164] sm:$0xf]
    %v140 = vld [vmem:[#allocation2 + $0x168] sm:$0xf]
    %v141 = vld [vmem:[#allocation2 + $0x16c] sm:$0xf]
    %v142 = vld [vmem:[#allocation2 + $0x170] sm:$0xf]
    %v143 = vld [vmem:[#allocation2 + $0x174] sm:$0xf]
    %v144 = vld [vmem:[#allocation2 + $0x178] sm:$0xf]
    %v145 = vld [vmem:[#allocation2 + $0x17c] sm:$0xf]
    %v146 = vld [vmem:[#allocation2 + $0x180] sm:$0xf]
    %v147 = vld [vmem:[#allocation2 + $0x184] sm:$0xf]
    %v148 = vld [vmem:[%s2] sm:$0x1]
    %v150 = vlaneseq
    %v151 = vshrl.u32 %v150, 7
    %v152 = vsub.s32 0, %v151
    %v153 = vrot.slane %v148, %v152
    %v163 = vcombine.low %v42, %v43
    %v164 = vcombine.high %v42, %v43
    %v165 = vcombine.low %v44, %v45
    %v166 = vcombine.high %v44, %v45
    %v167 = vcombine.low %v46, %v47
    %v168 = vcombine.high %v46, %v47
    %v169 = vcombine.low %v48, %v49
    %v170 = vcombine.high %v48, %v49
    %v172 = vunpack.c.l.s4 1966171168
    %v173 = vunpack.c.0.s8 %v172
    %v174 = vlaneseq
    %v175 = vshrl.u32 %v174, 7
    %v176 = vsub.s32 %v173, %v175
    %v177 = vrot.slane %v163, %v176
    %v179 = vunpack.c.l.s4 1966171168
    %v180 = vunpack.c.0.s8 %v179
    %v181 = vlaneseq
    %v182 = vshrl.u32 %v181, 7
    %v183 = vsub.s32 %v180, %v182
    %v184 = vrot.slane %v164, %v183
    %v186 = vunpack.c.l.s4 1966171168
    %v187 = vunpack.c.0.s8 %v186
    %v188 = vlaneseq
    %v189 = vshrl.u32 %v188, 7
    %v190 = vsub.s32 %v187, %v189
    %v191 = vrot.slane %v165, %v190
    %v193 = vunpack.c.l.s4 1966171168
    %v194 = vunpack.c.0.s8 %v193
    %v195 = vlaneseq
    %v196 = vshrl.u32 %v195, 7
    %v197 = vsub.s32 %v194, %v196
    %v198 = vrot.slane %v166, %v197
    %v200 = vunpack.c.l.s4 1966171168
    %v201 = vunpack.c.0.s8 %v200
    %v202 = vlaneseq
    %v203 = vshrl.u32 %v202, 7
    %v204 = vsub.s32 %v201, %v203
    %v205 = vrot.slane %v167, %v204
    %v207 = vunpack.c.l.s4 1966171168
    %v208 = vunpack.c.0.s8 %v207
    %v209 = vlaneseq
    %v210 = vshrl.u32 %v209, 7
    %v211 = vsub.s32 %v208, %v210
    %v212 = vrot.slane %v168, %v211
    %v214 = vunpack.c.l.s4 1966171168
    %v215 = vunpack.c.0.s8 %v214
    %v216 = vlaneseq
    %v217 = vshrl.u32 %v216, 7
    %v218 = vsub.s32 %v215, %v217
    %v219 = vrot.slane %v169, %v218
    %v221 = vunpack.c.l.s4 1966171168
    %v222 = vunpack.c.0.s8 %v221
    %v223 = vlaneseq
    %v224 = vshrl.u32 %v223, 7
    %v225 = vsub.s32 %v222, %v224
    %v226 = vrot.slane %v170, %v225
    %v227 = vcombine.low %v177, %v191
    %v228 = vcombine.high %v177, %v191
    %v229 = vcombine.low %v184, %v198
    %v230 = vcombine.high %v184, %v198
    %v231 = vcombine.low %v205, %v219
    %v232 = vcombine.high %v205, %v219
    %v233 = vcombine.low %v212, %v226
    %v234 = vcombine.high %v212, %v226
    %v236 = vunpack.c.l.s4 1966171168
    %v237 = vunpack.c.0.s8 %v236
    %v238 = vlaneseq
    %v239 = vshrl.u32 %v238, 7
    %v240 = vsub.s32 %v237, %v239
    %v241 = vrot.slane %v227, %v240
    %v243 = vunpack.c.l.s4 1966171168
    %v244 = vunpack.c.0.s8 %v243
    %v245 = vlaneseq
    %v246 = vshrl.u32 %v245, 7
    %v247 = vsub.s32 %v244, %v246
    %v248 = vrot.slane %v229, %v247
    %v250 = vunpack.c.l.s4 1966171168
    %v251 = vunpack.c.0.s8 %v250
    %v252 = vlaneseq
    %v253 = vshrl.u32 %v252, 7
    %v254 = vsub.s32 %v251, %v253
    %v255 = vrot.slane %v228, %v254
    %v257 = vunpack.c.l.s4 1966171168
    %v258 = vunpack.c.0.s8 %v257
    %v259 = vlaneseq
    %v260 = vshrl.u32 %v259, 7
    %v261 = vsub.s32 %v258, %v260
    %v262 = vrot.slane %v230, %v261
    %v264 = vunpack.c.l.s4 1966171168
    %v265 = vunpack.c.0.s8 %v264
    %v266 = vlaneseq
    %v267 = vshrl.u32 %v266, 7
    %v268 = vsub.s32 %v265, %v267
    %v269 = vrot.slane %v231, %v268
    %v271 = vunpack.c.l.s4 1966171168
    %v272 = vunpack.c.0.s8 %v271
    %v273 = vlaneseq
    %v274 = vshrl.u32 %v273, 7
    %v275 = vsub.s32 %v272, %v274
    %v276 = vrot.slane %v233, %v275
    %v278 = vunpack.c.l.s4 1966171168
    %v279 = vunpack.c.0.s8 %v278
    %v280 = vlaneseq
    %v281 = vshrl.u32 %v280, 7
    %v282 = vsub.s32 %v279, %v281
    %v283 = vrot.slane %v232, %v282
    %v285 = vunpack.c.l.s4 1966171168
    %v286 = vunpack.c.0.s8 %v285
    %v287 = vlaneseq
    %v288 = vshrl.u32 %v287, 7
    %v289 = vsub.s32 %v286, %v288
    %v290 = vrot.slane %v234, %v289
    %v291 = vcombine.low %v241, %v269
    %v292 = vcombine.high %v241, %v269
    %v293 = vcombine.low %v248, %v276
    %v294 = vcombine.high %v248, %v276
    %v295 = vcombine.low %v255, %v283
    %v296 = vcombine.high %v255, %v283
    %v297 = vcombine.low %v262, %v290
    %v402 = vunpack.c.l.b16 %v50
    %v403 = vunpack.c.l.b16 %v51
    %v404 = vunpack.c.l.b16 %v52
    %v405 = vunpack.c.l.b16 %v53
    %v406 = vunpack.c.l.b16 %v54
    %v407 = vunpack.c.l.b16 %v55
    %v408 = vunpack.c.l.b16 %v56
    %v409 = vunpack.c.l.b16 %v57
    %v410 = vunpack.c.l.b16 %v58
    %v411 = vunpack.c.l.b16 %v59
    %v412 = vunpack.c.l.b16 %v60
    %v413 = vunpack.c.l.b16 %v61
    %v414 = vunpack.c.l.b16 %v62
    %v415 = vunpack.c.l.b16 %v63
    %v416 = vunpack.c.l.b16 %v64
    %v417 = vunpack.c.l.b16 %v65
    %v418 = vunpack.c.l.b16 %v66
    %v419 = vunpack.c.l.b16 %v67
    %v420 = vunpack.c.l.b16 %v68
    %v421 = vunpack.c.l.b16 %v69
    %v422 = vunpack.c.l.b16 %v70
    %v423 = vunpack.c.l.b16 %v71
    %v424 = vunpack.c.l.b16 %v72
    %v425 = vunpack.c.l.b16 %v73
    %v426 = vunpack.c.l.b16 %v74
    %v427 = vunpack.c.l.b16 %v75
    %v428 = vunpack.c.l.b16 %v76
    %v429 = vunpack.c.l.b16 %v77
    %v430 = vunpack.c.l.b16 %v78
    %v431 = vunpack.c.l.b16 %v79
    %v432 = vunpack.c.l.b16 %v80
    %v433 = vunpack.c.l.b16 %v81
    %v434 = vunpack.c.l.b16 %v82
    %v435 = vunpack.c.l.b16 %v83
    %v436 = vunpack.c.l.b16 %v84
    %v437 = vunpack.c.l.b16 %v85
    %v438 = vunpack.c.l.b16 %v86
    %v439 = vunpack.c.l.b16 %v87
    %v440 = vunpack.c.l.b16 %v88
    %v441 = vunpack.c.l.b16 %v89
    %v442 = vunpack.c.l.b16 %v90
    %v443 = vunpack.c.l.b16 %v91
    %v444 = vunpack.c.l.b16 %v92
    %v445 = vunpack.c.l.b16 %v93
    %v446 = vunpack.c.l.b16 %v94
    %v447 = vunpack.c.l.b16 %v95
    %v448 = vunpack.c.l.b16 %v96
    %v449 = vunpack.c.l.b16 %v97
    %v450 = vunpack.c.l.b16 %v98
    %v451 = vunpack.c.l.b16 %v99
    %v452 = vunpack.c.l.b16 %v100
    %v453 = vunpack.c.l.b16 %v101
    %v454 = vunpack.c.l.b16 %v102
    %v455 = vunpack.c.l.b16 %v103
    %v456 = vunpack.c.l.b16 %v104
    %v457 = vunpack.c.l.b16 %v105
    %v458 = vunpack.c.l.b16 %v106
    %v459 = vunpack.c.l.b16 %v107
    %v460 = vunpack.c.l.b16 %v108
    %v461 = vunpack.c.l.b16 %v109
    %v462 = vunpack.c.l.b16 %v110
    %v463 = vunpack.c.l.b16 %v111
    %v464 = vunpack.c.l.b16 %v112
    %v465 = vunpack.c.l.b16 %v113
    %v466 = vunpack.c.l.b16 %v114
    %v467 = vunpack.c.l.b16 %v115
    %v468 = vunpack.c.l.b16 %v116
    %v469 = vunpack.c.l.b16 %v117
    %v470 = vunpack.c.l.b16 %v118
    %v471 = vunpack.c.l.b16 %v119
    %v472 = vunpack.c.l.b16 %v120
    %v473 = vunpack.c.l.b16 %v121
    %v474 = vunpack.c.l.b16 %v122
    %v475 = vunpack.c.l.b16 %v123
    %v476 = vunpack.c.l.b16 %v124
    %v477 = vunpack.c.l.b16 %v125
    %v478 = vunpack.c.l.b16 %v126
    %v479 = vunpack.c.l.b16 %v127
    %v480 = vunpack.c.l.b16 %v128
    %v481 = vunpack.c.l.b16 %v129
    %v482 = vunpack.c.l.b16 %v130
    %v483 = vunpack.c.l.b16 %v131
    %v484 = vunpack.c.l.b16 %v132
    %v485 = vunpack.c.l.b16 %v133
    %v486 = vunpack.c.l.b16 %v134
    %v487 = vunpack.c.l.b16 %v135
    %v488 = vunpack.c.l.b16 %v136
    %v489 = vunpack.c.l.b16 %v137
    %v490 = vunpack.c.l.b16 %v138
    %v491 = vunpack.c.l.b16 %v139
    %v492 = vunpack.c.l.b16 %v140
    %v493 = vunpack.c.l.b16 %v141
    %v494 = vunpack.c.l.b16 %v142
    %v495 = vunpack.c.l.b16 %v143
    %v496 = vunpack.c.l.b16 %v144
    %v497 = vunpack.c.l.b16 %v145
    %v498 = vunpack.c.l.b16 %v146
    %v499 = vunpack.c.l.b16 %v147
    %v500 = vpack.c.b16 %v403, %v402
    %v501 = vpack.c.b16 %v405, %v404
    %v502 = vpack.c.b16 %v407, %v406
    %v503 = vpack.c.b16 %v409, %v408
    %v504 = vpack.c.b16 %v411, %v410
    %v505 = vpack.c.b16 %v413, %v412
    %v506 = vpack.c.b16 %v415, %v414
    %v507 = vpack.c.b16 %v417, %v416
    %v508 = vpack.c.b16 %v419, %v418
    %v509 = vpack.c.b16 %v421, %v420
    %v510 = vpack.c.b16 %v423, %v422
    %v511 = vpack.c.b16 %v425, %v424
    %v512 = vpack.c.b16 %v427, %v426
    %v513 = vpack.c.b16 %v429, %v428
    %v514 = vpack.c.b16 %v431, %v430
    %v515 = vpack.c.b16 %v433, %v432
    %v516 = vpack.c.b16 %v435, %v434
    %v517 = vpack.c.b16 %v437, %v436
    %v518 = vpack.c.b16 %v439, %v438
    %v519 = vpack.c.b16 %v441, %v440
    %v520 = vpack.c.b16 %v443, %v442
    %v521 = vpack.c.b16 %v445, %v444
    %v522 = vpack.c.b16 %v447, %v446
    %v523 = vpack.c.b16 %v449, %v448
    %v524 = vpack.c.b16 %v451, %v450
    %v525 = vpack.c.b16 %v453, %v452
    %v526 = vpack.c.b16 %v455, %v454
    %v527 = vpack.c.b16 %v457, %v456
    %v528 = vpack.c.b16 %v459, %v458
    %v529 = vpack.c.b16 %v461, %v460
    %v530 = vpack.c.b16 %v463, %v462
    %v531 = vpack.c.b16 %v465, %v464
    %v532 = vpack.c.b16 %v467, %v466
    %v533 = vpack.c.b16 %v469, %v468
    %v534 = vpack.c.b16 %v471, %v470
    %v535 = vpack.c.b16 %v473, %v472
    %v536 = vpack.c.b16 %v475, %v474
    %v537 = vpack.c.b16 %v477, %v476
    %v538 = vpack.c.b16 %v479, %v478
    %v539 = vpack.c.b16 %v481, %v480
    %v540 = vpack.c.b16 %v483, %v482
    %v541 = vpack.c.b16 %v485, %v484
    %v542 = vpack.c.b16 %v487, %v486
    %v543 = vpack.c.b16 %v489, %v488
    %v544 = vpack.c.b16 %v491, %v490
    %v545 = vpack.c.b16 %v493, %v492
    %v546 = vpack.c.b16 %v495, %v494
    %v547 = vpack.c.b16 %v497, %v496
    %v548 = vpack.c.b16 %v499, %v498
    %vm598 = vcmask 130048
    %v600 = vsel %vm598, %v294, 0
    %602 = vmatprep.subr.bf16.mxu0 0
    %603 = vmatpush1.bf16.msra.mxu0 %v500
    %604 = vmatprep.subr.bf16.mxu0 0
    %605 = vmatpush1.bf16.msra.mxu0 %v501
    %606 = vmatprep.subr.bf16.mxu0 0
    %607 = vmatpush1.bf16.msra.mxu0 %v502
    %608 = vmatprep.subr.bf16.mxu0 0
    %609 = vmatpush1.bf16.msra.mxu0 %v503
    %610 = vmatprep.subr.bf16.mxu0 0
    %611 = vmatpush1.bf16.msra.mxu0 %v504
    %612 = vmatprep.subr.bf16.mxu0 0
    %613 = vmatpush1.bf16.msra.mxu0 %v505
    %614 = vmatprep.subr.bf16.mxu0 0
    %615 = vmatpush1.bf16.msra.mxu0 %v506
    %616 = vmatprep.subr.bf16.mxu0 0
    %617 = vmatpush1.bf16.msra.mxu0 %v507
    %618 = vmatprep.subr.bf16.mxu0 0
    %619 = vmatpush1.bf16.msra.mxu0 %v508
    %620 = vmatprep.subr.bf16.mxu0 0
    %621 = vmatpush1.bf16.msra.mxu0 %v509
    %622 = vmatprep.subr.bf16.mxu0 0
    %623 = vmatpush1.bf16.msra.mxu0 %v510
    %624 = vmatprep.subr.bf16.mxu0 0
    %625 = vmatpush1.bf16.msra.mxu0 %v511
    %626 = vmatprep.subr.bf16.mxu0 0
    %627 = vmatpush1.bf16.msra.mxu0 %v512
    %628 = vmatprep.subr.bf16.mxu0 0
    %629 = vmatpush1.bf16.msra.mxu0 %v513
    %630 = vmatprep.subr.bf16.mxu0 0
    %631 = vmatpush1.bf16.msra.mxu0 %v514
    %632 = vmatprep.subr.bf16.mxu0 0
    %633 = vmatpush1.bf16.msra.mxu0 %v515
    %634 = vmatprep.mubr.bf16.mxu0 %v295
    %635 = vmatmul.mubr.bf16.gmra.mrb[0].mxu0 %v291
    %v636 = vpop.f32.mrb[0].mxu0
    %v637 = vadd.f32 %v153, %v636
    %v638 = vpop.f32.mrb[0].mxu0
    %v639 = vpop.f32.mrb[0].mxu0
    %v640 = vadd.f32 %v153, %v639
    %v641 = vpop.f32.mrb[0].mxu0
    %642 = vdwg.mxu0
    %643 = vmatprep.subr.bf16.mxu0 0
    %644 = vmatpush1.bf16.msra.mxu0 %v516
    %645 = vmatprep.subr.bf16.mxu0 0
    %646 = vmatpush1.bf16.msra.mxu0 %v517
    %647 = vmatprep.subr.bf16.mxu0 0
    %648 = vmatpush1.bf16.msra.mxu0 %v518
    %649 = vmatprep.subr.bf16.mxu0 0
    %650 = vmatpush1.bf16.msra.mxu0 %v519
    %651 = vmatprep.subr.bf16.mxu0 0
    %652 = vmatpush1.bf16.msra.mxu0 %v520
    %653 = vmatprep.subr.bf16.mxu0 0
    %654 = vmatpush1.bf16.msra.mxu0 %v521
    %655 = vmatprep.subr.bf16.mxu0 0
    %656 = vmatpush1.bf16.msra.mxu0 %v522
    %657 = vmatprep.subr.bf16.mxu0 0
    %658 = vmatpush1.bf16.msra.mxu0 %v523
    %659 = vmatprep.subr.bf16.mxu0 0
    %660 = vmatpush1.bf16.msra.mxu0 %v524
    %661 = vmatprep.subr.bf16.mxu0 0
    %662 = vmatpush1.bf16.msra.mxu0 %v525
    %663 = vmatprep.subr.bf16.mxu0 0
    %664 = vmatpush1.bf16.msra.mxu0 %v526
    %665 = vmatprep.subr.bf16.mxu0 0
    %666 = vmatpush1.bf16.msra.mxu0 %v527
    %667 = vmatprep.subr.bf16.mxu0 0
    %668 = vmatpush1.bf16.msra.mxu0 %v528
    %669 = vmatprep.subr.bf16.mxu0 0
    %670 = vmatpush1.bf16.msra.mxu0 %v529
    %671 = vmatprep.subr.bf16.mxu0 0
    %672 = vmatpush1.bf16.msra.mxu0 %v530
    %673 = vmatprep.subr.bf16.mxu0 0
    %674 = vmatpush1.bf16.msra.mxu0 %v531
    %675 = vmatprep.mubr.bf16.mxu0 %v296
    %676 = vmatmul.mubr.bf16.gmra.mrb[0].mxu0 %v292
    %v677 = vpop.f32.mrb[0].mxu0
    %v678 = vadd.f32 %v637, %v677
    %v679 = vpop.f32.mrb[0].mxu0
    %v680 = vpop.f32.mrb[0].mxu0
    %v681 = vadd.f32 %v640, %v680
    %v682 = vpop.f32.mrb[0].mxu0
    %683 = vdwg.mxu0
    %684 = vmatprep.subr.bf16.mxu0 0
    %685 = vmatpush1.bf16.msra.mxu0 %v532
    %686 = vmatprep.subr.bf16.mxu0 0
    %687 = vmatpush1.bf16.msra.mxu0 %v533
    %688 = vmatprep.subr.bf16.mxu0 0
    %689 = vmatpush1.bf16.msra.mxu0 %v534
    %690 = vmatprep.subr.bf16.mxu0 0
    %691 = vmatpush1.bf16.msra.mxu0 %v535
    %692 = vmatprep.subr.bf16.mxu0 0
    %693 = vmatpush1.bf16.msra.mxu0 %v536
    %694 = vmatprep.subr.bf16.mxu0 0
    %695 = vmatpush1.bf16.msra.mxu0 %v537
    %696 = vmatprep.subr.bf16.mxu0 0
    %697 = vmatpush1.bf16.msra.mxu0 %v538
    %698 = vmatprep.subr.bf16.mxu0 0
    %699 = vmatpush1.bf16.msra.mxu0 %v539
    %700 = vmatprep.subr.bf16.mxu0 0
    %701 = vmatpush1.bf16.msra.mxu0 %v540
    %702 = vmatprep.subr.bf16.mxu0 0
    %703 = vmatpush1.bf16.msra.mxu0 %v541
    %704 = vmatprep.subr.bf16.mxu0 0
    %705 = vmatpush1.bf16.msra.mxu0 %v542
    %706 = vmatprep.subr.bf16.mxu0 0
    %707 = vmatpush1.bf16.msra.mxu0 %v543
    %708 = vmatprep.subr.bf16.mxu0 0
    %709 = vmatpush1.bf16.msra.mxu0 %v544
    %710 = vmatprep.subr.bf16.mxu0 0
    %711 = vmatpush1.bf16.msra.mxu0 %v545
    %712 = vmatprep.subr.bf16.mxu0 0
    %713 = vmatpush1.bf16.msra.mxu0 %v546
    %714 = vmatprep.subr.bf16.mxu0 0
    %715 = vmatpush1.bf16.msra.mxu0 %v547
    %716 = vmatprep.mubr.bf16.mxu0 %v297
    %717 = vmatmul.mubr.bf16.gmra.mrb[0].mxu0 %v293
    %v718 = vpop.f32.mrb[0].mxu0
    %v719 = vadd.f32 %v678, %v718
    %v720 = vpop.f32.mrb[0].mxu0
    %v721 = vpop.f32.mrb[0].mxu0
    %v722 = vadd.f32 %v681, %v721
    %v723 = vpop.f32.mrb[0].mxu0
    %724 = vdwg.mxu0
    %725 = vmatprep.subr.bf16.mxu0 0
    %726 = vmatpush1.bf16.msra.mxu0 %v548
    %727 = vmatprep.subr.bf16.mxu0 0
    %728 = vmatpush1.bf16.msra.mxu0 0
    %729 = vmatprep.subr.bf16.mxu0 0
    %730 = vmatpush1.bf16.msra.mxu0 0
    %731 = vmatprep.subr.bf16.mxu0 0
    %732 = vmatpush1.bf16.msra.mxu0 0
    %733 = vmatprep.subr.bf16.mxu0 0
    %734 = vmatpush1.bf16.msra.mxu0 0
    %735 = vmatprep.subr.bf16.mxu0 0
    %736 = vmatpush1.bf16.msra.mxu0 0
    %737 = vmatprep.subr.bf16.mxu0 0
    %738 = vmatpush1.bf16.msra.mxu0 0
    %739 = vmatprep.subr.bf16.mxu0 0
    %740 = vmatpush1.bf16.msra.mxu0 0
    %741 = vmatprep.subr.bf16.mxu0 0
    %742 = vmatpush1.bf16.msra.mxu0 0
    %743 = vmatprep.subr.bf16.mxu0 0
    %744 = vmatpush1.bf16.msra.mxu0 0
    %745 = vmatprep.subr.bf16.mxu0 0
    %746 = vmatpush1.bf16.msra.mxu0 0
    %747 = vmatprep.subr.bf16.mxu0 0
    %748 = vmatpush1.bf16.msra.mxu0 0
    %749 = vmatprep.subr.bf16.mxu0 0
    %750 = vmatpush1.bf16.msra.mxu0 0
    %751 = vmatprep.subr.bf16.mxu0 0
    %752 = vmatpush1.bf16.msra.mxu0 0
    %753 = vmatprep.subr.bf16.mxu0 0
    %754 = vmatpush1.bf16.msra.mxu0 0
    %755 = vmatprep.subr.bf16.mxu0 0
    %756 = vmatpush1.bf16.msra.mxu0 0
    %757 = vmatprep.mubr.bf16.mxu0 0
    %758 = vmatmul.mubr.bf16.gmra.mrb[0].mxu0 %v600
    %v759 = vpop.f32.mrb[0].mxu0
    %v760 = vadd.f32 %v719, %v759
    %v761 = vpop.f32.mrb[0].mxu0
    %v762 = vpop.f32.mrb[0].mxu0
    %v763 = vadd.f32 %v722, %v762
    %v764 = vpop.f32.mrb[0].mxu0
    %765 = vdwg.mxu0
    %v766 = vmax.f32 %v760, 0.0
    %v767 = vmax.f32 %v763, 0.0
    %v768 = vpack.c.bf16 %v767, %v766
    %v769 = vld [vmem:[%s3] sm:$0xf]
    %v770 = vld [vmem:[%s3 + $0x4] sm:$0xf]
    %v771 = vld [vmem:[%s3 + $0x8] sm:$0xf]
    %v772 = vld [vmem:[%s3 + $0xc] sm:$0xf]
    %v773 = vld [vmem:[%s3 + $0x10] sm:$0xf]
    %v774 = vld [vmem:[%s3 + $0x14] sm:$0xf]
    %v775 = vld [vmem:[%s3 + $0x18] sm:$0xf]
    %v776 = vld [vmem:[%s3 + $0x1c] sm:$0xf]
    %v777 = vld [vmem:[%s3 + $0x20] sm:$0xf]
    %v778 = vld [vmem:[%s3 + $0x24] sm:$0xf]
    %v779 = vld [vmem:[%s3 + $0x28] sm:$0xf]
    %v780 = vld [vmem:[%s3 + $0x2c] sm:$0xf]
    %v781 = vld [vmem:[%s3 + $0x30] sm:$0xf]
    %v782 = vld [vmem:[%s3 + $0x34] sm:$0xf]
    %v783 = vld [vmem:[%s3 + $0x38] sm:$0xf]
    %v784 = vld [vmem:[%s3 + $0x3c] sm:$0xf]
    %v785 = vld [vmem:[%s4] sm:$0x1]
    %v787 = vlaneseq
    %v788 = vshrl.u32 %v787, 7
    %v789 = vsub.s32 0, %v788
    %v790 = vrot.slane %v785, %v789
    %v808 = vunpack.c.l.b16 %v769
    %v809 = vunpack.c.l.b16 %v770
    %v810 = vunpack.c.l.b16 %v771
    %v811 = vunpack.c.l.b16 %v772
    %v812 = vunpack.c.l.b16 %v773
    %v813 = vunpack.c.l.b16 %v774
    %v814 = vunpack.c.l.b16 %v775
    %v815 = vunpack.c.l.b16 %v776
    %v816 = vunpack.c.l.b16 %v777
    %v817 = vunpack.c.l.b16 %v778
    %v818 = vunpack.c.l.b16 %v779
    %v819 = vunpack.c.l.b16 %v780
    %v820 = vunpack.c.l.b16 %v781
    %v821 = vunpack.c.l.b16 %v782
    %v822 = vunpack.c.l.b16 %v783
    %v823 = vunpack.c.l.b16 %v784
    %v824 = vpack.c.b16 %v809, %v808
    %v825 = vpack.c.b16 %v811, %v810
    %v826 = vpack.c.b16 %v813, %v812
    %v827 = vpack.c.b16 %v815, %v814
    %v828 = vpack.c.b16 %v817, %v816
    %v829 = vpack.c.b16 %v819, %v818
    %v830 = vpack.c.b16 %v821, %v820
    %v831 = vpack.c.b16 %v823, %v822
    %840 = vmatprep.subr.bf16.mxu0 0
    %841 = vmatpush1.bf16.msra.mxu0 %v824
    %842 = vmatprep.subr.bf16.mxu0 0
    %843 = vmatpush1.bf16.msra.mxu0 %v825
    %844 = vmatprep.subr.bf16.mxu0 0
    %845 = vmatpush1.bf16.msra.mxu0 %v826
    %846 = vmatprep.subr.bf16.mxu0 0
    %847 = vmatpush1.bf16.msra.mxu0 %v827
    %848 = vmatprep.subr.bf16.mxu0 0
    %849 = vmatpush1.bf16.msra.mxu0 %v828
    %850 = vmatprep.subr.bf16.mxu0 0
    %851 = vmatpush1.bf16.msra.mxu0 %v829
    %852 = vmatprep.subr.bf16.mxu0 0
    %853 = vmatpush1.bf16.msra.mxu0 %v830
    %854 = vmatprep.subr.bf16.mxu0 0
    %855 = vmatpush1.bf16.msra.mxu0 %v831
    %856 = vmatprep.subr.bf16.mxu0 0
    %857 = vmatpush1.bf16.msra.mxu0 0
    %858 = vmatprep.subr.bf16.mxu0 0
    %859 = vmatpush1.bf16.msra.mxu0 0
    %860 = vmatprep.subr.bf16.mxu0 0
    %861 = vmatpush1.bf16.msra.mxu0 0
    %862 = vmatprep.subr.bf16.mxu0 0
    %863 = vmatpush1.bf16.msra.mxu0 0
    %864 = vmatprep.subr.bf16.mxu0 0
    %865 = vmatpush1.bf16.msra.mxu0 0
    %866 = vmatprep.subr.bf16.mxu0 0
    %867 = vmatpush1.bf16.msra.mxu0 0
    %868 = vmatprep.subr.bf16.mxu0 0
    %869 = vmatpush1.bf16.msra.mxu0 0
    %870 = vmatprep.subr.bf16.mxu0 0
    %871 = vmatpush1.bf16.msra.mxu0 0
    %872 = vmatprep.mubr.bf16.mxu0 0
    %873 = vmatmul.mubr.bf16.gmra.mrb[0].mxu0 %v768
    %v874 = vpop.f32.mrb[0].mxu0
    %v875 = vadd.f32 %v790, %v874
    %v876 = vpop.f32.mrb[0].mxu0
    %v877 = vpop.f32.mrb[0].mxu0
    %v878 = vadd.f32 %v790, %v877
    %v879 = vpop.f32.mrb[0].mxu0
    %880 = vdwg.mxu0
    %v881 = vmax.f32 %v875, 0.0
    %v882 = vmax.f32 %v878, 0.0
    %v883 = vpack.c.bf16 %v882, %v881
    %v884 = vld [vmem:[%s5] sm:$0xf]
    %v885 = vld [vmem:[%s5 + $0x4] sm:$0xf]
    %v886 = vld [vmem:[%s5 + $0x8] sm:$0xf]
    %v887 = vld [vmem:[%s5 + $0xc] sm:$0xf]
    %v888 = vld [vmem:[%s5 + $0x10] sm:$0xf]
    %v889 = vld [vmem:[%s5 + $0x14] sm:$0xf]
    %v890 = vld [vmem:[%s5 + $0x18] sm:$0xf]
    %v891 = vld [vmem:[%s5 + $0x1c] sm:$0xf]
    %v892 = vld [vmem:[%s5 + $0x20] sm:$0xf]
    %v893 = vld [vmem:[%s5 + $0x24] sm:$0xf]
    %v894 = vld [vmem:[%s5 + $0x28] sm:$0xf]
    %v895 = vld [vmem:[%s5 + $0x2c] sm:$0xf]
    %v896 = vld [vmem:[%s5 + $0x30] sm:$0xf]
    %v897 = vld [vmem:[%s5 + $0x34] sm:$0xf]
    %v898 = vld [vmem:[%s5 + $0x38] sm:$0xf]
    %v899 = vld [vmem:[%s5 + $0x3c] sm:$0xf]
    %v900 = vld [vmem:[%s6] sm:$0x1]
    %v902 = vlaneseq
    %v903 = vshrl.u32 %v902, 7
    %v904 = vsub.s32 0, %v903
    %v905 = vrot.slane %v900, %v904
    %v923 = vunpack.c.l.b16 %v884
    %v924 = vunpack.c.l.b16 %v885
    %v925 = vunpack.c.l.b16 %v886
    %v926 = vunpack.c.l.b16 %v887
    %v927 = vunpack.c.l.b16 %v888
    %v928 = vunpack.c.l.b16 %v889
    %v929 = vunpack.c.l.b16 %v890
    %v930 = vunpack.c.l.b16 %v891
    %v931 = vunpack.c.l.b16 %v892
    %v932 = vunpack.c.l.b16 %v893
    %v933 = vunpack.c.l.b16 %v894
    %v934 = vunpack.c.l.b16 %v895
    %v935 = vunpack.c.l.b16 %v896
    %v936 = vunpack.c.l.b16 %v897
    %v937 = vunpack.c.l.b16 %v898
    %v938 = vunpack.c.l.b16 %v899
    %v939 = vpack.c.b16 %v924, %v923
    %v940 = vpack.c.b16 %v926, %v925
    %v941 = vpack.c.b16 %v928, %v927
    %v942 = vpack.c.b16 %v930, %v929
    %v943 = vpack.c.b16 %v932, %v931
    %v944 = vpack.c.b16 %v934, %v933
    %v945 = vpack.c.b16 %v936, %v935
    %v946 = vpack.c.b16 %v938, %v937
    %955 = vmatprep.subr.bf16.mxu0 0
    %956 = vmatpush1.bf16.msra.mxu0 %v939
    %957 = vmatprep.subr.bf16.mxu0 0
    %958 = vmatpush1.bf16.msra.mxu0 %v940
    %959 = vmatprep.subr.bf16.mxu0 0
    %960 = vmatpush1.bf16.msra.mxu0 %v941
    %961 = vmatprep.subr.bf16.mxu0 0
    %962 = vmatpush1.bf16.msra.mxu0 %v942
    %963 = vmatprep.subr.bf16.mxu0 0
    %964 = vmatpush1.bf16.msra.mxu0 %v943
    %965 = vmatprep.subr.bf16.mxu0 0
    %966 = vmatpush1.bf16.msra.mxu0 %v944
    %967 = vmatprep.subr.bf16.mxu0 0
    %968 = vmatpush1.bf16.msra.mxu0 %v945
    %969 = vmatprep.subr.bf16.mxu0 0
    %970 = vmatpush1.bf16.msra.mxu0 %v946
    %971 = vmatprep.subr.bf16.mxu0 0
    %972 = vmatpush1.bf16.msra.mxu0 0
    %973 = vmatprep.subr.bf16.mxu0 0
    %974 = vmatpush1.bf16.msra.mxu0 0
    %975 = vmatprep.subr.bf16.mxu0 0
    %976 = vmatpush1.bf16.msra.mxu0 0
    %977 = vmatprep.subr.bf16.mxu0 0
    %978 = vmatpush1.bf16.msra.mxu0 0
    %979 = vmatprep.subr.bf16.mxu0 0
    %980 = vmatpush1.bf16.msra.mxu0 0
    %981 = vmatprep.subr.bf16.mxu0 0
    %982 = vmatpush1.bf16.msra.mxu0 0
    %983 = vmatprep.subr.bf16.mxu0 0
    %984 = vmatpush1.bf16.msra.mxu0 0
    %985 = vmatprep.subr.bf16.mxu0 0
    %986 = vmatpush1.bf16.msra.mxu0 0
    %987 = vmatprep.mubr.bf16.mxu0 0
    %988 = vmatmul.mubr.bf16.gmra.mrb[0].mxu0 %v883
    %v989 = vpop.f32.mrb[0].mxu0
    %v990 = vadd.f32 %v905, %v989
    %v991 = vpop.f32.mrb[0].mxu0
    %v992 = vpop.f32.mrb[0].mxu0
    %v993 = vadd.f32 %v905, %v992
    %v994 = vpop.f32.mrb[0].mxu0
    %995 = vdwg.mxu0
    %vm996 = vcmask 80896
    %997 = vst.msk [vmem:[#allocation5] sm:$0xff] %vm996, %v990
    %998 = vst.msk [vmem:[#allocation5 + $0x8] sm:$0xff] %vm996, %v993
    // Predicated region
    $region34: #{tpu_custom_call.1} parent=1 // pred_check
      _
    $region35: #{tpu_custom_call.1} parent=1 // pred_check_branch
      %1000 = sbr.rel (0) target = $region37
    $region36: #{tpu_custom_call.1} parent=1 // pred_region
      %s1002 = ssub.s32 256, 32
      %1003 = vsyncadd [#allocation4], %s1002
      %s1004 = sshll.u32 [#allocation5], 4
      %s1005 = int_to_ptr.vmem [resolvable:$true] %s1004
      %1010 = dma.vmem_to_hbm [thread:$0]  %s1005, 32, %s7, [#allocation4], 32, 32, 2
    $region37: #{tpu_custom_call.1} parent=1 // pred_fallthru
      _
    // Predicated region
    $region38: #{tpu_custom_call.1} parent=1 // pred_check
      _
    $region39: #{tpu_custom_call.1} parent=1 // pred_check_branch
      %1012 = sbr.rel (0) target = $region41
    $region40: #{tpu_custom_call.1} parent=1 // pred_region
      %1013 = dma.done [#allocation4], 256
    $region41: #{tpu_custom_call.1} parent=1 // pred_fallthru
      _
    %1014 = vsyncpa [#allocation3], 1
    %1015 = vsyncpa [#allocation4], 1

</llo_original>
